<compile_context>
chip_gen: v7x
topology: tpu7x:2x2x1
jax: 0.10.0
libtpu: 0.0.40
codegen_flags: <defaults>
</compile_context>

<pallas_src>
import functools

import jax
import jax.numpy as jnp
from jax import lax
from jax.experimental import pallas as pl
from jax.experimental.pallas import tpu as pltpu


_CompilerParams = getattr(pltpu, "CompilerParams", None)
if _CompilerParams is None:  # very old jax fallback
    _CompilerParams = pltpu.TPUCompilerParams  # pragma: no cover


def _compiler_params(dimension_semantics, vmem_limit_bytes):
    return _CompilerParams(dimension_semantics=dimension_semantics,
                           vmem_limit_bytes=int(vmem_limit_bytes))


def _vmem_limit_bytes():
    """Scoped-VMEM limit sized to the actual chip (v5e/v6e: 128 MiB, v7x: 64 MiB)."""
    cap = 64 * 1024 * 1024  # v7x per-TensorCore physical VMEM (the smallest)
    try:
        cap = int(pltpu.get_tpu_info().vmem_capacity_bytes)
    except Exception:
        pass
    return min(cap * 3 // 4, 100 * 1024 * 1024)


def _tile_sub(dim, preferred):
    """Largest multiple-of-8 divisor of dim that is <= preferred, else full dim."""
    if dim <= preferred:
        return dim
    best = 0
    for c in range(8, preferred + 1, 8):
        if dim % c == 0:
            best = c
    return best if best else dim


def _tile_lane(dim, preferred):
    """Largest 256- (v6e/v7x MXU width) or 128-aligned divisor <= preferred, else full."""
    if dim <= preferred:
        return dim
    for align in (256, 128):
        best = 0
        for c in range(align, preferred + 1, align):
            if dim % c == 0:
                best = c
        if best:
            return best
    return dim


# --------------------- Q/K/V projection: (B,S,hidden) -> (B,U,S,D) ---------------------

def _head_proj_kernel(x_ref, w_ref, b_ref, o_ref, acc_ref):
    # grid = (B, S-tiles, heads, K-tiles); reduction over the last (K) axis.
    @pl.when(pl.program_id(3) == 0)
    def _():
        acc_ref[...] = jnp.zeros_like(acc_ref)

    acc_ref[...] += jnp.dot(x_ref[0], w_ref[0],
                            preferred_element_type=jnp.float32)

    @pl.when(pl.program_id(3) == pl.num_programs(3) - 1)
    def _():
        o_ref[0, 0] = (acc_ref[...] + b_ref[0]).astype(o_ref.dtype)


def _project_to_heads(x, w_heads, b_heads, vmem_limit):
    """x: (B, S, hidden); w_heads: (U, hidden, D); b_heads: (U, 1, D) f32.

    Returns (B, U, S, D) in x.dtype — per-head layout emitted straight from the
    matmul, so no (B, S, H*D) -> (B, H, S, D) transpose pass ever touches HBM."""
    B, S, hidden = x.shape
    U, _, D = w_heads.shape
    tm = _tile_sub(S, 256)
    tk = _tile_lane(hidden, 512)
    return pl.pallas_call(
        _head_proj_kernel,
        out_shape=jax.ShapeDtypeStruct((B, U, S, D), x.dtype),
        grid=(B, S // tm, U, hidden // tk),
        in_specs=[
            pl.BlockSpec((1, tm, tk), lambda b, si, u, k: (b, si, k)),
            pl.BlockSpec((1, tk, D), lambda b, si, u, k: (u, k, 0)),
            pl.BlockSpec((1, 1, D), lambda b, si, u, k: (u, 0, 0)),
        ],
        out_specs=pl.BlockSpec((1, 1, tm, D), lambda b, si, u, k: (b, u, si, 0)),
        scratch_shapes=[pltpu.VMEM((tm, D), jnp.float32)],
        compiler_params=_compiler_params(
            ("parallel", "parallel", "parallel", "arbitrary"), vmem_limit),
    )(x, w_heads, b_heads)


# --------------------------------- attention core ---------------------------------

def _attn_kernel(*refs, scale, has_bias, exact):
    if has_bias:
        q_ref, k_ref, v_ref, mask_ref, bias_ref, scores_ref, ctx_ref = refs
    else:
        q_ref, k_ref, v_ref, mask_ref, scores_ref, ctx_ref = refs
        bias_ref = None

    q = q_ref[0, 0] * scale          # (tq, D): scale folded into the small q tile
    k = k_ref[0, 0]                  # (Sk, D)
    v = v_ref[0, 0]                  # (Sk, D)

    # scaled q_h @ k_h^T : contract the last axes directly (no k transpose relayout)
    s = lax.dot_general(q, k, dimension_numbers=(((1,), (1,)), ((), ())),
                        preferred_element_type=jnp.float32)
    if bias_ref is not None:
        s = s + bias_ref[0, 0]                       # broadcasts (1|tq, 1|Sk)
    s = jnp.where(mask_ref[0] != 0, jnp.float32(-1e9), s)   # torch masked_fill(-1e9)

    # softmax over keys in f32
    m = jnp.max(s, axis=-1, keepdims=True)
    e = jnp.exp(s - m)
    denom = jnp.sum(e, axis=-1, keepdims=True)
    if exact:                      # f32-parity path
        attn = e / denom
    else:                          # bf16 path: EUP reciprocal is effectively free
        attn = e * pl.reciprocal(denom, approx=True)

    scores_ref[0, 0] = attn.astype(scores_ref.dtype)
    # TODO(synk): attn_dropout treated as identity (eval mode).
    ctx_ref[0, 0] = jnp.dot(attn.astype(v.dtype), v,
                            preferred_element_type=jnp.float32).astype(ctx_ref.dtype)


def _mha_core(q4, k4, v4, head_offsets, num_heads, mask_i8, bias, scale,
              scores_dtype, exact, vmem_limit):
    B, _, Sq, D = q4.shape
    Sk = k4.shape[2]
    cdt = q4.dtype
    itemsize = jnp.dtype(cdt).itemsize
    s_item = jnp.dtype(scores_dtype).itemsize
    has_bias = bias is not None
    if has_bias:
        Bb, Hb, Sqb, Skb = bias.shape
    else:
        Bb = Hb = Sqb = Skb = 1

    # q-tile: largest divisor of Sq (multiple of 8, <=512) whose double-buffered
    # per-step footprint fits the budget.  The full-Sk K/V term is independent of
    # tq; if even the smallest tile exceeds the budget we keep it (see TODO above).
    budget = int(vmem_limit * 0.9)

    def step_bytes(t):
        b_bytes = ((t if Sqb == Sq else 1) * Skb * 4) if has_bias else 0
        return 2 * (t * D * itemsize            # q tile
                    + 2 * Sk * D * itemsize     # K + V (full Sk, double-buffered)
                    + t * Sk                    # int8 mask
                    + b_bytes                   # f32 bias
                    + t * Sk * s_item           # scores output tile
                    + t * D * itemsize)         # ctx output tile

    cands = [c for c in range(8, min(Sq, 512) + 1, 8) if Sq % c == 0] or [Sq]
    tq = cands[0]
    for c in sorted(cands, reverse=True):
        if step_bytes(c) <= budget:
            tq = c
            break

    off_q, off_k, off_v = head_offsets
    in_specs = [
        pl.BlockSpec((1, 1, tq, D), lambda b, h, qi: (b, off_q + h, qi, 0)),
        pl.BlockSpec((1, 1, Sk, D), lambda b, h, qi: (b, off_k + h, 0, 0)),
        pl.BlockSpec((1, 1, Sk, D), lambda b, h, qi: (b, off_v + h, 0, 0)),
        pl.BlockSpec((1, tq, Sk), lambda b, h, qi: (b, qi, 0)),
    ]
    args = [q4, k4, v4, mask_i8]
    if has_bias:
        # size-1 bias dims are resolved here (block index 0) — never broadcast in HBM
        bq_blk = tq if Sqb == Sq else 1
        in_specs.append(pl.BlockSpec(
            (1, 1, bq_blk, Skb),
            lambda b, h, qi: (b if Bb > 1 else 0, h if Hb > 1 else 0,
                              qi if Sqb > 1 else 0, 0)))
        args.append(bias)

    kernel = functools.partial(_attn_kernel, scale=scale, has_bias=has_bias,
                               exact=exact)
    scores, ctx4 = pl.pallas_call(
        kernel,
        out_shape=(jax.ShapeDtypeStruct((B, num_heads, Sq, Sk), scores_dtype),
                   jax.ShapeDtypeStruct((B, num_heads, Sq, D), cdt)),
        grid=(B, num_heads, Sq // tq),   # q-tiles innermost: K/V resident per (b,h)
        in_specs=in_specs,
        out_specs=(pl.BlockSpec((1, 1, tq, Sk), lambda b, h, qi: (b, h, qi, 0)),
                   pl.BlockSpec((1, 1, tq, D), lambda b, h, qi: (b, h, qi, 0))),
        compiler_params=_compiler_params(("parallel", "parallel", "parallel"),
                                         vmem_limit),
    )(*args)
    return scores, ctx4


# ----------------- output projection: (B,H,Sq,D) x (H,D,hidden) -> (B,Sq,hidden) -----------------

def _out_proj_kernel(x_ref, w_ref, b_ref, o_ref, acc_ref):
    # grid = (B, Sq-tiles, N-tiles, heads); reduction over the head axis.
    @pl.when(pl.program_id(3) == 0)
    def _():
        acc_ref[...] = jnp.zeros_like(acc_ref)

    acc_ref[...] += jnp.dot(x_ref[0, 0], w_ref[0],
                            preferred_element_type=jnp.float32)

    @pl.when(pl.program_id(3) == pl.num_programs(3) - 1)
    def _():
        o_ref[0] = (acc_ref[...] + b_ref[...]).astype(o_ref.dtype)


def _output_projection(ctx4, w_o_heads, b_o, vmem_limit):
    """ctx4: (B, H, Sq, D); w_o_heads: (H, D, hidden); b_o: (1, hidden) f32."""
    B, H, Sq, D = ctx4.shape
    hidden = w_o_heads.shape[-1]
    tm = _tile_sub(Sq, 256)
    tn = _tile_lane(hidden, 512)
    return pl.pallas_call(
        _out_proj_kernel,
        out_shape=jax.ShapeDtypeStruct((B, Sq, hidden), jnp.float32),
        grid=(B, Sq // tm, hidden // tn, H),
        in_specs=[
            pl.BlockSpec((1, 1, tm, D), lambda b, i, j, h: (b, h, i, 0)),
            pl.BlockSpec((1, D, tn), lambda b, i, j, h: (h, 0, j)),
            pl.BlockSpec((1, tn), lambda b, i, j, h: (0, j)),
        ],
        out_specs=pl.BlockSpec((1, tm, tn), lambda b, i, j, h: (b, i, j)),
        scratch_shapes=[pltpu.VMEM((tm, tn), jnp.float32)],
        compiler_params=_compiler_params(
            ("parallel", "parallel", "parallel", "arbitrary"), vmem_limit),
    )(ctx4, w_o_heads, b_o)


# ------------------------------------ wrapper ------------------------------------

def multi_head_attention(q, k, v, params, attn_mask, attn_bias=None,
                         mxu_dtype=jnp.bfloat16, scores_dtype=jnp.float32):
    """Functional equivalent of MultiHeadAttention.forward (eval mode).

    q, k, v   : (B, S, hidden) float32
    attn_mask : (B, Sq, Sk) bool/int (nonzero = masked out, torch masked_fill(-1e9))
    attn_bias : optional, broadcastable to (B, H, Sq, Sk)
    Returns (out (B, Sq, hidden) f32, attention_scores (B, H, Sq, Sk)).

    mxu_dtype=jnp.float32 gives the closest parity with the f32 PyTorch module;
    the bf16 default trades ~1e-2 relative matmul error for MXU throughput.
    scores_dtype=jnp.bfloat16 halves the scores writeback (useful on v5e)."""
    num_heads = int(params["num_heads"])
    hidden = q.shape[-1]
    D = hidden // num_heads
    scale = float(D) ** (-0.5)
    B, Sq, _ = q.shape
    Sk = k.shape[1]
    cdt = jnp.dtype(mxu_dtype)
    exact = cdt == jnp.dtype(jnp.float32)
    vmem_limit = _vmem_limit_bytes()

    def head_w(w):   # (hidden, H*D) -> (H, hidden, D): one-time weight relayout
        return jnp.transpose(w.reshape(hidden, num_heads, D), (1, 0, 2)).astype(cdt)

    def head_b(b):   # (H*D,) -> (H, 1, D)
        return b.reshape(num_heads, 1, D).astype(jnp.float32)

    if q is k and k is v:
        # self-attention: ONE projection with stacked weights; attention reads
        # q/k/v out of the stacked (B, 3H, S, D) buffer via head offsets.
        w_all = jnp.concatenate([head_w(params["wq"]), head_w(params["wk"]),
                                 head_w(params["wv"])], axis=0)
        b_all = jnp.concatenate([head_b(params["bq"]), head_b(params["bk"]),
                                 head_b(params["bv"])], axis=0)
        qkv4 = _project_to_heads(q.astype(cdt), w_all, b_all, vmem_limit)
        q4 = k4 = v4 = qkv4
        head_offsets = (0, num_heads, 2 * num_heads)
    else:
        q4 = _project_to_heads(q.astype(cdt), head_w(params["wq"]),
                               head_b(params["bq"]), vmem_limit)
        k4 = _project_to_heads(k.astype(cdt), head_w(params["wk"]),
                               head_b(params["bk"]), vmem_limit)
        v4 = _project_to_heads(v.astype(cdt), head_w(params["wv"]),
                               head_b(params["bv"]), vmem_limit)
        head_offsets = (0, 0, 0)

    mask_i8 = attn_mask.astype(jnp.int8)       # 1 byte/elem, shared by all heads

    bias = None
    if attn_bias is not None:
        bias = jnp.asarray(attn_bias, jnp.float32)   # f32 for parity with torch
        while bias.ndim < 4:
            bias = bias[None]
        for got, full, name in ((bias.shape[0], B, "batch"),
                                (bias.shape[1], num_heads, "head"),
                                (bias.shape[2], Sq, "query"),
                                (bias.shape[3], Sk, "key")):
            if got not in (1, full):
                raise ValueError(f"attn_bias {name} dim {got} is not broadcastable")

    scores, ctx4 = _mha_core(q4, k4, v4, head_offsets, num_heads, mask_i8, bias,
                             scale, scores_dtype, exact, vmem_limit)

    w_o_heads = params["wo"].reshape(num_heads, D, hidden).astype(cdt)
    b_o = params["bo"].reshape(1, hidden).astype(jnp.float32)
    out = _output_projection(ctx4, w_o_heads, b_o, vmem_limit)
    return out, scores


def init_params(key, hidden_dim, num_heads):
    attn_dim = hidden_dim // num_heads
    proj = num_heads * attn_dim
    ks = jax.random.split(key, 8)
    scale = 0.02
    return {
        "num_heads": num_heads,
        "wq": scale * jax.random.normal(ks[0], (hidden_dim, proj), jnp.float32),
        "bq": scale * jax.random.normal(ks[1], (proj,), jnp.float32),
        "wk": scale * jax.random.normal(ks[2], (hidden_dim, proj), jnp.float32),
        "bk": scale * jax.random.normal(ks[3], (proj,), jnp.float32),
        "wv": scale * jax.random.normal(ks[4], (hidden_dim, proj), jnp.float32),
        "bv": scale * jax.random.normal(ks[5], (proj,), jnp.float32),
        "wo": scale * jax.random.normal(ks[6], (proj, hidden_dim), jnp.float32),
        "bo": scale * jax.random.normal(ks[7], (hidden_dim,), jnp.float32),
    }


def _reference_forward(q, k, v, params, attn_mask, attn_bias):
    """Pure-JAX mirror of the PyTorch module (f32, HIGHEST matmul precision)."""
    hp = lax.Precision.HIGHEST
    H = int(params["num_heads"])
    hidden = q.shape[-1]
    D = hidden // H
    B, Sq, _ = q.shape
    Sk = k.shape[1]
    qh = (jnp.matmul(q, params["wq"], precision=hp) + params["bq"]
          ).reshape(B, Sq, H, D).transpose(0, 2, 1, 3)
    kh = (jnp.matmul(k, params["wk"], precision=hp) + params["bk"]
          ).reshape(B, Sk, H, D).transpose(0, 2, 1, 3)
    vh = (jnp.matmul(v, params["wv"], precision=hp) + params["bv"]
          ).reshape(B, Sk, H, D).transpose(0, 2, 1, 3)
    s = jnp.einsum("bhqd,bhkd->bhqk", qh, kh, precision=hp) * (float(D) ** -0.5)
    if attn_bias is not None:
        s = s + attn_bias
    s = jnp.where(attn_mask[:, None, :, :], -1e9, s)
    scores = jax.nn.softmax(s, axis=-1)
    ctx = jnp.einsum("bhqk,bhkd->bhqd", scores, vh, precision=hp)
    ctx = ctx.transpose(0, 2, 1, 3).reshape(B, Sq, H * D)
    out = jnp.matmul(ctx, params["wo"], precision=hp) + params["bo"]
    return out, scores


# -------------------------------------- main --------------------------------------

if __name__ == "__main__":
    B, S, HIDDEN, HEADS = 2, 8, 32, 4

    key = jax.random.PRNGKey(0)
    kp, kq, kk, kv, kb, km = jax.random.split(key, 6)
    params = init_params(kp, HIDDEN, HEADS)

    q = jax.random.normal(kq, (B, S, HIDDEN), jnp.float32)
    k = jax.random.normal(kk, (B, S, HIDDEN), jnp.float32)
    v = jax.random.normal(kv, (B, S, HIDDEN), jnp.float32)

    # attention bias broadcast over heads, like torch `x + attn_bias`
    attn_bias = 0.1 * jax.random.normal(kb, (B, 1, S, S), jnp.float32)
    # boolean mask, True = masked; keep each query's own position unmasked
    attn_mask = jax.random.bernoulli(km, p=0.2, shape=(B, S, S))
    attn_mask = attn_mask & ~jnp.eye(S, dtype=bool)[None, :, :]

    # 1) cross-attention path (separate projections), default bf16 MXU operands
    out, attention_scores = multi_head_attention(q, k, v, params, attn_mask,
                                                 attn_bias=attn_bias)
    jax.block_until_ready((out, attention_scores))
    assert out.shape == (B, S, HIDDEN)
    assert attention_scores.shape == (B, HEADS, S, S)
    assert bool(jnp.all(jnp.isfinite(out)))
    assert bool(jnp.all(jnp.isfinite(attention_scores)))

    # 2) fused self-attention path, f32 MXU parity mode, checked vs pure-JAX ref
    out_sa, scores_sa = multi_head_attention(q, q, q, params, attn_mask,
                                             attn_bias=attn_bias,
                                             mxu_dtype=jnp.float32)
    jax.block_until_ready((out_sa, scores_sa))
    ref_out, ref_scores = _reference_forward(q, q, q, params, attn_mask, attn_bias)
    assert bool(jnp.allclose(scores_sa, ref_scores, atol=2e-3, rtol=2e-3))
    assert bool(jnp.allclose(out_sa, ref_out, atol=2e-3, rtol=2e-3))

    print("KERNEL_OK")
</pallas_src>

<mosaic_0001>
module attributes {stable_mosaic.version = 11 : i64} {
  func.func @_head_proj_kernel(%arg0: i32, %arg1: i32, %arg2: i32, %arg3: i32, %arg4: memref<1x8x32xbf16, #tpu.memory_space<vmem>>, %arg5: memref<1x32x8xbf16, #tpu.memory_space<vmem>>, %arg6: memref<1x1x8xf32, #tpu.memory_space<vmem>>, %arg7: memref<1x1x8x8xbf16, #tpu.memory_space<vmem>>, %arg8: memref<8x8xf32, #tpu.memory_space<vmem>>) attributes {dimension_semantics = [#tpu.dimension_semantics<parallel>, #tpu.dimension_semantics<parallel>, #tpu.dimension_semantics<parallel>, #tpu.dimension_semantics<arbitrary>], iteration_bounds = array<i64: 2, 1, 4, 1>, scalar_prefetch = 0 : i64, scratch_operands = 1 : i64, tpu.core_type = #tpu.core_type<tc>, window_params = [{transform_indices = @transform_0, window_bounds = array<i64: 1, 8, 32>}, {transform_indices = @transform_1, window_bounds = array<i64: 1, 32, 8>}, {transform_indices = @transform_2, window_bounds = array<i64: 1, 1, 8>}, {transform_indices = @transform_3, window_bounds = array<i64: 1, 1, 8, 8>}]} {
    %c0_i32 = arith.constant 0 : i32
    %0 = arith.cmpi eq, %arg3, %c0_i32 : i32
    %1 = arith.extui %0 : i1 to i32
    %c0_i32_0 = arith.constant 0 : i32
    %2 = arith.cmpi ne, %1, %c0_i32_0 : i32
    scf.if %2 {
      %cst_12 = arith.constant 0.000000e+00 : f32
      %14 = vector.broadcast %cst_12 : f32 to vector<8x8xf32>
      %c0_13 = arith.constant 0 : index
      %c0_14 = arith.constant 0 : index
      %15 = vector.load %arg8[%c0_13, %c0_14] : memref<8x8xf32, #tpu.memory_space<vmem>>, vector<8x8xf32>
      tpu.vector_store %arg8[%c0_13, %c0_14], %14 {strides = array<i32>} : memref<8x8xf32, #tpu.memory_space<vmem>>, vector<8x8xf32>,
    } else {
    }
    %c0 = arith.constant 0 : index
    %c0_1 = arith.constant 0 : index
    %3 = vector.load %arg8[%c0, %c0_1] : memref<8x8xf32, #tpu.memory_space<vmem>>, vector<8x8xf32>
    %c0_2 = arith.constant 0 : index
    %c0_3 = arith.constant 0 : index
    %c0_4 = arith.constant 0 : index
    %4 = vector.load %arg4[%c0_2, %c0_3, %c0_4] : memref<1x8x32xbf16, #tpu.memory_space<vmem>>, vector<1x8x32xbf16>
    %5 = vector.shape_cast %4 : vector<1x8x32xbf16> to vector<8x32xbf16>
    %c0_5 = arith.constant 0 : index
    %c0_6 = arith.constant 0 : index
    %c0_7 = arith.constant 0 : index
    %6 = vector.load %arg5[%c0_5, %c0_6, %c0_7] : memref<1x32x8xbf16, #tpu.memory_space<vmem>>, vector<1x32x8xbf16>
    %7 = vector.shape_cast %6 : vector<1x32x8xbf16> to vector<32x8xbf16>
    %cst = arith.constant dense<0.000000e+00> : vector<8x8xf32>
    %8 = tpu.matmul %5, %7, %cst {dimension_numbers = #tpu.dot_dimension_numbers<[1], [0], [0], [1], [0, 0, 1, 1], [], []>} : vector<8x32xbf16>, vector<32x8xbf16>, vector<8x8xf32> -> vector<8x8xf32>
    %9 = arith.addf %3, %8 : vector<8x8xf32>
    %c0_8 = arith.constant 0 : index
    %c0_9 = arith.constant 0 : index
    %10 = vector.load %arg8[%c0_8, %c0_9] : memref<8x8xf32, #tpu.memory_space<vmem>>, vector<8x8xf32>
    tpu.vector_store %arg8[%c0_8, %c0_9], %9 {strides = array<i32>} : memref<8x8xf32, #tpu.memory_space<vmem>>, vector<8x8xf32>,
    %c0_i32_10 = arith.constant 0 : i32
    %11 = arith.cmpi eq, %arg3, %c0_i32_10 : i32
    %12 = arith.extui %11 : i1 to i32
    %c0_i32_11 = arith.constant 0 : i32
    %13 = arith.cmpi ne, %12, %c0_i32_11 : i32
    scf.if %13 {
      %c0_12 = arith.constant 0 : index
      %c0_13 = arith.constant 0 : index
      %14 = vector.load %arg8[%c0_12, %c0_13] : memref<8x8xf32, #tpu.memory_space<vmem>>, vector<8x8xf32>
      %c0_14 = arith.constant 0 : index
      %c0_15 = arith.constant 0 : index
      %c0_16 = arith.constant 0 : index
      %15 = vector.load %arg6[%c0_14, %c0_15, %c0_16] : memref<1x1x8xf32, #tpu.memory_space<vmem>>, vector<1x1x8xf32>
      %16 = vector.shape_cast %15 : vector<1x1x8xf32> to vector<1x8xf32>
      %17 = vector.broadcast %16 : vector<1x8xf32> to vector<8x8xf32>
      %18 = arith.addf %14, %17 : vector<8x8xf32>
      %19 = arith.truncf %18 : vector<8x8xf32> to vector<8x8xbf16>
      %c0_17 = arith.constant 0 : index
      %c0_18 = arith.constant 0 : index
      %c0_19 = arith.constant 0 : index
      %c0_20 = arith.constant 0 : index
      %20 = vector.load %arg7[%c0_17, %c0_18, %c0_19, %c0_20] : memref<1x1x8x8xbf16, #tpu.memory_space<vmem>>, vector<1x1x8x8xbf16>
      %21 = vector.shape_cast %20 : vector<1x1x8x8xbf16> to vector<8x8xbf16>
      %22 = vector.shape_cast %19 : vector<8x8xbf16> to vector<1x1x8x8xbf16>
      tpu.vector_store %arg7[%c0_17, %c0_18, %c0_19, %c0_20], %22 {strides = array<i32>} : memref<1x1x8x8xbf16, #tpu.memory_space<vmem>>, vector<1x1x8x8xbf16>,
    } else {
    }
    return
  }
  func.func @transform_0(%arg0: i32, %arg1: i32, %arg2: i32, %arg3: i32) -> (i32, i32, i32) {
    %c0_i32 = arith.constant 0 : i32
    return %arg0, %arg1, %arg3 : i32, i32, i32
  }
  func.func @transform_1(%arg0: i32, %arg1: i32, %arg2: i32, %arg3: i32) -> (i32, i32, i32) {
    %c0_i32 = arith.constant 0 : i32
    %c0_i32_0 = arith.constant 0 : i32
    return %arg2, %arg3, %c0_i32 : i32, i32, i32
  }
  func.func @transform_2(%arg0: i32, %arg1: i32, %arg2: i32, %arg3: i32) -> (i32, i32, i32) {
    %c0_i32 = arith.constant 0 : i32
    %c0_i32_0 = arith.constant 0 : i32
    %c0_i32_1 = arith.constant 0 : i32
    return %arg2, %c0_i32, %c0_i32_0 : i32, i32, i32
  }
  func.func @transform_3(%arg0: i32, %arg1: i32, %arg2: i32, %arg3: i32) -> (i32, i32, i32, i32) {
    %c0_i32 = arith.constant 0 : i32
    %c0_i32_0 = arith.constant 0 : i32
    return %arg0, %arg2, %arg1, %c0_i32 : i32, i32, i32, i32
  }
}

</mosaic_0001>

<llo_original>
// kernel: tpu_custom_call.1
$region0: #{tpu_custom_call.1}
  #allocation0 [shape = 'u32[]', space=smem, size = 0x4, offset = 0x4, fixed_abs, tag = 'smem constant byte address 0x4 - core index']
  #allocation1 [shape = 'u32[144,128]{1,0:T(1,128)}', space=vmem, size = 0x12000, scoped, tag = 'internal scratch']
  #allocation2 [shape = 'f32[8,8]{1,0:T(8,128)}', space=vmem, size = 0x1000, scoped, tag = 'scratch operand']
  %s0 = inlined_call_operand.vmem [shape: bf16[2,8,32], index: 0, kind: input, shape index: {}]
  %s1 = inlined_call_operand.vmem [shape: bf16[4,32,8], index: 1, kind: input, shape index: {}]
  %s2 = inlined_call_operand.vmem [shape: f32[4,1,8], index: 2, kind: input, shape index: {}]
  %s3 = inlined_call_operand.hbm [shape: bf16[2,4,8,8], index: 3, kind: output, shape index: {}]
  %s4 = sld [smem:[#allocation0]]
  $region53: #{tpu_custom_call.1} parent=0
    _
  %s6 = ssub.s32 1, %s4
  %s7 = scalar_select 0, %s6, %s4
  $region1: #{tpu_custom_call.1} parent=0
    #allocation3 [shape = 'u8[4096]{0}', space=vmem, size = 0x1000, scoped, tag = 'output window, operand 0']
    #allocation4 [shape = 's32[2]{0}', space=sflag, size = 0x8, scoped, tag = 'scoped memory for tpu_custom_call.1']
    %8 = vsyncpa [#allocation4], 0
    %s9 = scalar_lea.sflag [#allocation4], 1
    %10 = vsyncpa %s9, 0
    loop: start=0, step=1, limit=10
    $region2: #{tpu_custom_call.1} parent=1 // loop_pre_header
      _
    $region3: #{tpu_custom_call.1} parent=1 // loop_header
      %s12 = sphi 0, %s16
      %p13 = scmp.ge.s32.totalorder %s12, 10
      %s19 = sphi 0, %s45
      %s20 = sphi 0, %s41
      %s21 = sphi 0, %s37
      %s22 = sphi 0, %s33
      %s23 = sphi 0, %s19
      %s24 = sphi 0, %s20
      %s25 = sphi 0, %s21
      %s26 = sphi 0, %s22
      %s27 = sphi 0, %s23
      %s28 = sphi 0, %s24
      %s29 = sphi 0, %s25
      %s30 = sphi 0, %s26
      %s52 = sphi 0, %s54
      %s55 = sphi 0, %s52
      %s56 = sphi 0, %s55
      %s72 = sphi 0, %s56
      %s80 = sphi 0, %s82
      %s83 = sphi 0, %s80
      %s84 = sphi 0, %s83
      %s100 = sphi 0, %s84
      %s106 = sphi 0, %s108
      %s109 = sphi 0, %s106
      %s110 = sphi 0, %s109
      %s126 = sphi 0, %s110
      %s136 = sphi 0, %s138
      %s139 = sphi 0, %s136
      %s140 = sphi 0, %s139
      %s156 = sphi 0, %s140
    $region4: #{tpu_custom_call.1} parent=1 // loop_header_branch
      %15 = sbr.rel (%p13) target = $region8
    $region5: #{tpu_custom_call.1} parent=1 // loop_body
      %s17 = ssub.s32 %s12, 1
      %s18 = ssub.s32 %s12, 2
      %s31 = sadd.s32 1, %s22
      %p32 = scmp.ge.s32.totalorder %s31, 1
      %s33 = scalar_select %p32, 0, %s31
      %s34 = sadd.s32 1, %s21
      %s35 = scalar_select %p32, %s34, %s21
      %p36 = scmp.ge.s32.totalorder %s35, 4
      %s37 = scalar_select %p36, 0, %s35
      %s38 = sadd.s32 1, %s20
      %s39 = scalar_select %p36, %s38, %s20
      %p40 = scmp.ge.s32.totalorder %s39, 1
      %s41 = scalar_select %p40, 0, %s39
      %s42 = sadd.s32 1, %s19
      %s43 = scalar_select %p40, %s42, %s19
      %p44 = scmp.ge.s32.totalorder %s43, 2
      %s45 = scalar_select %p44, 0, %s43
      %s46 = ssub.s32 %s19, %s45
      %s47 = ssub.s32 %s20, %s41
      %s48 = sor.u32 %s46, %s47
      %s49 = ssub.s32 %s22, %s33
      %s50 = sor.u32 %s48, %s49
      %p51 = scmp.eq.s32.totalorder %s50, 0
      %s53 = sadd.s32 %s52, 1
      %s54 = scalar_select %p51, %s52, %s53
      %p57 = pneg %p51
      %p58 = scmp.eq.s32.totalorder %s12, 7
      %p59 = por %p57, %p58
      %p60 = scmp.ne.s32.totalorder %s52, %s55
      %p61 = scmp.eq.s32.totalorder %s12, 0
      %p62 = por %p60, %p61
      %p63 = scmp.ne.s32.totalorder %s52, %s55
      %p64 = scmp.eq.s32.totalorder %s17, 7
      %p65 = por %p63, %p64
      %p66 = scmp.ne.s32.totalorder %s55, %s56
      %p67 = scmp.eq.s32.totalorder %s17, 0
      %p68 = por %p66, %p67
      %p69 = scmp.ne.s32.totalorder %s55, %s56
      %p70 = scmp.eq.s32.totalorder %s18, 7
      %p71 = por %p69, %p70
      %p73 = scmp.ne.s32.totalorder %s56, %s72
      %p74 = scmp.eq.s32.totalorder %s18, 0
      %p75 = por %p73, %p74
      %s76 = ssub.s32 %s21, %s37
      %s77 = ssub.s32 %s22, %s33
      %s78 = sor.u32 %s76, %s77
      %p79 = scmp.eq.s32.totalorder %s78, 0
      %s81 = sadd.s32 %s80, 1
      %s82 = scalar_select %p79, %s80, %s81
      %p85 = pneg %p79
      %p86 = scmp.eq.s32.totalorder %s12, 7
      %p87 = por %p85, %p86
      %p88 = scmp.ne.s32.totalorder %s80, %s83
      %p89 = scmp.eq.s32.totalorder %s12, 0
      %p90 = por %p88, %p89
      %p91 = scmp.ne.s32.totalorder %s80, %s83
      %p92 = scmp.eq.s32.totalorder %s17, 7
      %p93 = por %p91, %p92
      %p94 = scmp.ne.s32.totalorder %s83, %s84
      %p95 = scmp.eq.s32.totalorder %s17, 0
      %p96 = por %p94, %p95
      %p97 = scmp.ne.s32.totalorder %s83, %s84
      %p98 = scmp.eq.s32.totalorder %s18, 7
      %p99 = por %p97, %p98
      %p101 = scmp.ne.s32.totalorder %s84, %s100
      %p102 = scmp.eq.s32.totalorder %s18, 0
      %p103 = por %p101, %p102
      %s104 = ssub.s32 %s21, %s37
      %p105 = scmp.eq.s32.totalorder %s104, 0
      %s107 = sadd.s32 %s106, 1
      %s108 = scalar_select %p105, %s106, %s107
      %p111 = pneg %p105
      %p112 = scmp.eq.s32.totalorder %s12, 7
      %p113 = por %p111, %p112
      %p114 = scmp.ne.s32.totalorder %s106, %s109
      %p115 = scmp.eq.s32.totalorder %s12, 0
      %p116 = por %p114, %p115
      %p117 = scmp.ne.s32.totalorder %s106, %s109
      %p118 = scmp.eq.s32.totalorder %s17, 7
      %p119 = por %p117, %p118
      %p120 = scmp.ne.s32.totalorder %s109, %s110
      %p121 = scmp.eq.s32.totalorder %s17, 0
      %p122 = por %p120, %p121
      %p123 = scmp.ne.s32.totalorder %s109, %s110
      %p124 = scmp.eq.s32.totalorder %s18, 7
      %p125 = por %p123, %p124
      %p127 = scmp.ne.s32.totalorder %s110, %s126
      %p128 = scmp.eq.s32.totalorder %s18, 0
      %p129 = por %p127, %p128
      %s130 = ssub.s32 %s19, %s45
      %s131 = ssub.s32 %s21, %s37
      %s132 = sor.u32 %s130, %s131
      %s133 = ssub.s32 %s20, %s41
      %s134 = sor.u32 %s132, %s133
      %p135 = scmp.eq.s32.totalorder %s134, 0
      %s137 = sadd.s32 %s136, 1
      %s138 = scalar_select %p135, %s136, %s137
      %p141 = pneg %p135
      %p142 = scmp.eq.s32.totalorder %s12, 7
      %p143 = por %p141, %p142
      %p144 = scmp.ne.s32.totalorder %s136, %s139
      %p145 = scmp.eq.s32.totalorder %s12, 0
      %p146 = por %p144, %p145
      %p147 = scmp.ne.s32.totalorder %s136, %s139
      %p148 = scmp.eq.s32.totalorder %s17, 7
      %p149 = por %p147, %p148
      %p150 = scmp.ne.s32.totalorder %s139, %s140
      %p151 = scmp.eq.s32.totalorder %s17, 0
      %p152 = por %p150, %p151
      %p153 = scmp.ne.s32.totalorder %s139, %s140
      %p154 = scmp.eq.s32.totalorder %s18, 7
      %p155 = por %p153, %p154
      %p157 = scmp.ne.s32.totalorder %s140, %s156
      %p158 = scmp.eq.s32.totalorder %s18, 0
      %p159 = por %p157, %p158
      %p160 = scmp.le.s32.totalorder 1, %s12
      %p161 = scmp.lt.s32.totalorder %s12, 9
      %p162 = pnand %p160, %p161
      %p163 = pneg %p162
      // Predicated region
      $region9: #{tpu_custom_call.1} parent=5 // pred_check
        _
      $region10: #{tpu_custom_call.1} parent=5 // pred_check_branch
        %165 = sbr.rel (%p162) target = $region12
      $region11: #{tpu_custom_call.1} parent=5 // pred_region
        %s166 = ssub.s32 %s12, 1
      $region12: #{tpu_custom_call.1} parent=5 // pred_fallthru
        _
      %p167 = scmp.lt.s32.totalorder %s12, 8
      // Predicated region
      $region13: #{tpu_custom_call.1} parent=5 // pred_check
        %p168 = pneg %p167
      $region14: #{tpu_custom_call.1} parent=5 // pred_check_branch
        %170 = sbr.rel (%p168) target = $region16
      $region15: #{tpu_custom_call.1} parent=5 // pred_region
        // Predicated region
        $region17: #{tpu_custom_call.1} parent=15 // pred_check
          %p171 = pneg %p62
        $region18: #{tpu_custom_call.1} parent=15 // pred_check_branch
          %173 = sbr.rel (%p171) target = $region20
        $region19: #{tpu_custom_call.1} parent=15 // pred_region
          %p174 = scmp.lt.s32.totalorder %s19, 1
          %s175 = scalar_select %p174, %s19, 1
          %p176 = scmp.lt.s32.totalorder %s20, 0
          %s177 = scalar_select %p176, %s20, 0
          %p178 = scmp.lt.s32.totalorder %s22, 0
          %s179 = scalar_select %p178, %s22, 0
          %s180 = sadd.s32 %s179, %s177
          %s181 = sadd.s32 %s180, %s175
          %s182 = smul.addr %s181, 4
          %s183 = scalar_lea.vmem %s0, %s182
        $region20: #{tpu_custom_call.1} parent=15 // pred_fallthru
          _
        // Predicated region
        $region21: #{tpu_custom_call.1} parent=15 // pred_check
          %p184 = pneg %p90
        $region22: #{tpu_custom_call.1} parent=15 // pred_check_branch
          %186 = sbr.rel (%p184) target = $region24
        $region23: #{tpu_custom_call.1} parent=15 // pred_region
          %s187 = smul.u32 4, %s22
          %p188 = scmp.lt.s32.totalorder %s21, 3
          %s189 = scalar_select %p188, %s21, 3
          %p190 = scmp.lt.s32.totalorder %s187, 3
          %s191 = scalar_select %p190, %s187, 3
          %s192 = smul.addr %s189, 4
          %s193 = sadd.s32 %s191, %s192
          %s194 = smul.addr %s193, 4
          %s195 = scalar_lea.vmem %s1, %s194
          %s196 = smul.u32 4, %s22
        $region24: #{tpu_custom_call.1} parent=15 // pred_fallthru
          _
        // Predicated region
        $region25: #{tpu_custom_call.1} parent=15 // pred_check
          %p197 = pneg %p116
        $region26: #{tpu_custom_call.1} parent=15 // pred_check_branch
          %199 = sbr.rel (%p197) target = $region28
        $region27: #{tpu_custom_call.1} parent=15 // pred_region
          %p200 = scmp.lt.s32.totalorder %s21, 3
          %s201 = scalar_select %p200, %s21, 3
          %s202 = scalar_lea.vmem %s2, %s201
        $region28: #{tpu_custom_call.1} parent=15 // pred_fallthru
          _
      $region16: #{tpu_custom_call.1} parent=5 // pred_fallthru
        _
      %p203 = scmp.le.s32.totalorder 1, %s12
      %p204 = scmp.lt.s32.totalorder %s12, 9
      %p205 = pnand %p203, %p204
      %p206 = pneg %p205
      // Predicated region
      $region29: #{tpu_custom_call.1} parent=5 // pred_check
        _
      $region30: #{tpu_custom_call.1} parent=5 // pred_check_branch
        %208 = sbr.rel (%p205) target = $region32
      $region31: #{tpu_custom_call.1} parent=5 // pred_region
        %s209 = ssub.s32 %s12, 1
        %p210 = scmp.lt.s32.totalorder %s23, 1
        %s211 = scalar_select %p210, %s23, 1
        %p212 = scmp.lt.s32.totalorder %s24, 0
        %s213 = scalar_select %p212, %s24, 0
        %p214 = scmp.lt.s32.totalorder %s26, 0
        %s215 = scalar_select %p214, %s26, 0
        %s216 = sadd.s32 %s215, %s213
        %s217 = sadd.s32 %s216, %s211
        %s218 = smul.addr %s217, 4
        %s219 = scalar_lea.vmem %s0, %s218
        %p220 = pneg %p68
        %p221 = pneg %p65
        %s222 = smul.u32 4, %s26
        %p223 = scmp.lt.s32.totalorder %s25, 3
        %s224 = scalar_select %p223, %s25, 3
        %p225 = scmp.lt.s32.totalorder %s222, 3
        %s226 = scalar_select %p225, %s222, 3
        %s227 = smul.addr %s224, 4
        %s228 = sadd.s32 %s226, %s227
        %s229 = smul.addr %s228, 4
        %s230 = scalar_lea.vmem %s1, %s229
        %p231 = pneg %p96
        %p232 = pneg %p93
        %p233 = scmp.lt.s32.totalorder %s25, 3
        %s234 = scalar_select %p233, %s25, 3
        %s235 = scalar_lea.vmem %s2, %s234
        %p236 = pneg %p122
        %p237 = pneg %p119
        %p238 = pneg %p152
        %p239 = pneg %p149
        %s240 = sand.u32 %s139, 1
        %s241 = scalar_lea.sflag [#allocation4], %s240
        %s242 = sand.u32 %s139, 1
        %s243 = smul.addr %s242, 4
        %s244 = scalar_lea.vmem [#allocation3], %s243
        %p245 = scmp.lt.s32.totalorder %s23, 1
        %s246 = scalar_select %p245, %s23, 1
        %p247 = scmp.lt.s32.totalorder %s24, 0
        %s248 = scalar_select %p247, %s24, 0
        %p249 = scmp.lt.s32.totalorder %s26, 0
        %s250 = scalar_select %p249, %s26, 0
        %s251 = sadd.s32 %s250, %s248
        %s252 = sadd.s32 %s251, %s246
        %s253 = smul.addr %s252, 4
        %s254 = scalar_lea.vmem %s0, %s253
        %s255 = smul.u32 4, %s26
        %p256 = scmp.lt.s32.totalorder %s25, 3
        %s257 = scalar_select %p256, %s25, 3
        %p258 = scmp.lt.s32.totalorder %s255, 3
        %s259 = scalar_select %p258, %s255, 3
        %s260 = smul.addr %s257, 4
        %s261 = sadd.s32 %s259, %s260
        %s262 = smul.addr %s261, 4
        %s263 = scalar_lea.vmem %s1, %s262
        %s264 = smul.u32 4, %s26
        %p265 = scmp.lt.s32.totalorder %s25, 3
        %s266 = scalar_select %p265, %s25, 3
        %s267 = scalar_lea.vmem %s2, %s266
        %p269 = scmp.eq.s32.totalorder %s26, 0
        // Predicated region
        $region33: #{tpu_custom_call.1} parent=31 // pred_check
          %p270 = pneg %p269
        $region34: #{tpu_custom_call.1} parent=31 // pred_check_branch
          %272 = sbr.rel (%p270) target = $region36
        $region35: #{tpu_custom_call.1} parent=31 // pred_region
          %vm273 = vcmask 64512
          %274 = vst.msk [vmem:[#allocation2] sm:$0xff] %vm273, 0.0
        $region36: #{tpu_custom_call.1} parent=31 // pred_fallthru
          _
        %v275 = vld [vmem:[#allocation2] sm:$0xff]
        %v276 = vld [vmem:[%s254] sm:$0xf]
        %v277 = vld [vmem:[%s263] sm:$0xf]
        %v278 = vld [vmem:[%s263 + $0x4] sm:$0xf]
        %v279 = vld [vmem:[%s263 + $0x8] sm:$0xf]
        %v280 = vld [vmem:[%s263 + $0xc] sm:$0xf]
        %v285 = vunpack.c.l.b16 %v277
        %v286 = vunpack.c.l.b16 %v278
        %v287 = vunpack.c.l.b16 %v279
        %v288 = vunpack.c.l.b16 %v280
        %v289 = vpack.c.b16 %v286, %v285
        %v290 = vpack.c.b16 %v288, %v287
        %vm293 = vcmask 261120
        %v295 = vsel %vm293, %v276, 0
        %297 = vmatprep.subr.bf16.mxu0 0
        %298 = vmatpush1.bf16.msra.mxu0 %v289
        %299 = vmatprep.subr.bf16.mxu0 0
        %300 = vmatpush1.bf16.msra.mxu0 %v290
        %301 = vmatprep.subr.bf16.mxu0 0
        %302 = vmatpush1.bf16.msra.mxu0 0
        %303 = vmatprep.subr.bf16.mxu0 0
        %304 = vmatpush1.bf16.msra.mxu0 0
        %305 = vmatprep.subr.bf16.mxu0 0
        %306 = vmatpush1.bf16.msra.mxu0 0
        %307 = vmatprep.subr.bf16.mxu0 0
        %308 = vmatpush1.bf16.msra.mxu0 0
        %309 = vmatprep.subr.bf16.mxu0 0
        %310 = vmatpush1.bf16.msra.mxu0 0
        %311 = vmatprep.subr.bf16.mxu0 0
        %312 = vmatpush1.bf16.msra.mxu0 0
        %313 = vmatprep.subr.bf16.mxu0 0
        %314 = vmatpush1.bf16.msra.mxu0 0
        %315 = vmatprep.subr.bf16.mxu0 0
        %316 = vmatpush1.bf16.msra.mxu0 0
        %317 = vmatprep.subr.bf16.mxu0 0
        %318 = vmatpush1.bf16.msra.mxu0 0
        %319 = vmatprep.subr.bf16.mxu0 0
        %320 = vmatpush1.bf16.msra.mxu0 0
        %321 = vmatprep.subr.bf16.mxu0 0
        %322 = vmatpush1.bf16.msra.mxu0 0
        %323 = vmatprep.subr.bf16.mxu0 0
        %324 = vmatpush1.bf16.msra.mxu0 0
        %325 = vmatprep.subr.bf16.mxu0 0
        %326 = vmatpush1.bf16.msra.mxu0 0
        %327 = vmatprep.subr.bf16.mxu0 0
        %328 = vmatpush1.bf16.msra.mxu0 0
        %329 = vmatprep.mubr.bf16.mxu0 0
        %330 = vmatmul.mubr.bf16.gmra.mrb[0].mxu0 %v295
        %v331 = vpop.f32.mrb[0].mxu0
        %v332 = vadd.f32 0.0, %v331
        %v333 = vpop.f32.mrb[0].mxu0
        %v334 = vpop.f32.mrb[0].mxu0
        %v335 = vpop.f32.mrb[0].mxu0
        %336 = vdwg.mxu0
        %v337 = vadd.f32 %v275, %v332
        %vm338 = vcmask 64512
        %339 = vst.msk [vmem:[#allocation2] sm:$0xff] %vm338, %v337
        // Predicated region
        $region37: #{tpu_custom_call.1} parent=31 // pred_check
          %p340 = pneg %p269
        $region38: #{tpu_custom_call.1} parent=31 // pred_check_branch
          %342 = sbr.rel (%p340) target = $region40
        $region39: #{tpu_custom_call.1} parent=31 // pred_region
          %v343 = vld [vmem:[#allocation2] sm:$0xff]
          %v344 = vld [vmem:[%s267] sm:$0x1]
          %v346 = vlaneseq
          %v347 = vshrl.u32 %v346, 7
          %v348 = vsub.s32 0, %v347
          %v349 = vrot.slane %v344, %v348
          %v351 = vadd.f32 %v343, %v349
          %v352 = vpack.c.bf16 %v351, %v351
          %vm353 = vcmask 60416
          %354 = vst.msk [vmem:[%s244] sm:$0xf] %vm353, %v352
        $region40: #{tpu_custom_call.1} parent=31 // pred_fallthru
          _
        %s355 = sand.u32 %s139, 1
        %s356 = scalar_lea.sflag [#allocation4], %s355
        %s357 = sand.u32 %s139, 1
        %s358 = smul.addr %s357, 4
        %s359 = scalar_lea.vmem [#allocation3], %s358
        // Predicated region
        $region41: #{tpu_custom_call.1} parent=31 // pred_check
          %p360 = pneg %p149
        $region42: #{tpu_custom_call.1} parent=31 // pred_check_branch
          %362 = sbr.rel (%p360) target = $region44
        $region43: #{tpu_custom_call.1} parent=31 // pred_region
          %s364 = ssub.s32 64, 64
          %365 = vsyncadd %s356, %s364
          %s366 = sadd.s32 %s24, %s25
          %s367 = smul.addr %s23, 4
          %s368 = sadd.s32 %s366, %s367
          %s369 = smul.addr %s368, 64
          %s370 = scalar_lea.hbm %s3, %s369
          %s372 = sshll.u32 %s359, 4
          %s373 = int_to_ptr.vmem [resolvable:$true] %s372
          %375 = dma.vmem_to_hbm [thread:$0]  %s373, 64, %s370, %s356
        $region44: #{tpu_custom_call.1} parent=31 // pred_fallthru
          _
      $region32: #{tpu_custom_call.1} parent=5 // pred_fallthru
        _
      %p376 = scmp.le.s32.totalorder 2, %s12
      // Predicated region
      $region45: #{tpu_custom_call.1} parent=5 // pred_check
        %p377 = pneg %p376
      $region46: #{tpu_custom_call.1} parent=5 // pred_check_branch
        %379 = sbr.rel (%p377) target = $region48
      $region47: #{tpu_custom_call.1} parent=5 // pred_region
        %s380 = ssub.s32 %s12, 2
        // Predicated region
        $region49: #{tpu_custom_call.1} parent=47 // pred_check
          %p381 = pneg %p155
        $region50: #{tpu_custom_call.1} parent=47 // pred_check_branch
          %383 = sbr.rel (%p381) target = $region52
        $region51: #{tpu_custom_call.1} parent=47 // pred_region
          %s384 = sand.u32 %s140, 1
          %s385 = scalar_lea.sflag [#allocation4], %s384
          %s386 = sand.u32 %s140, 1
          %s387 = smul.addr %s386, 4
          %s388 = scalar_lea.vmem [#allocation3], %s387
          %389 = dma.done %s385, 64
        $region52: #{tpu_custom_call.1} parent=47 // pred_fallthru
          _
      $region48: #{tpu_custom_call.1} parent=5 // pred_fallthru
        _
    $region6: #{tpu_custom_call.1} parent=1 // loop_footer
      %s16 = sadd.s32 1, %s12
    $region7: #{tpu_custom_call.1} parent=1 // loop_footer_branch
      %11 = sbr.rel target = $region3
    $region8: #{tpu_custom_call.1} parent=1 // loop_exit
      _
    %390 = vsyncpa [#allocation4], 1
    %s391 = scalar_lea.sflag [#allocation4], 1
    %392 = vsyncpa %s391, 1

</llo_original>
